<compile_context>
chip_gen: v7x
topology: tpu7x:2x2x1
jax: 0.10.0
libtpu: 0.0.40
codegen_flags: <defaults>
</compile_context>

<pallas_src>
import math

import jax
import jax.numpy as jnp
from jax.experimental import pallas as pl
from jax.experimental.pallas import tpu as pltpu

_SQRT_2_OVER_PI = math.sqrt(2.0 / math.pi)


def _gelu_kernel(x_ref, o_ref):
    # Compute in f32 regardless of input dtype (consistent across chip gens).
    x = x_ref[...].astype(jnp.float32)
    # tanh goes to the EUP slot; the polynomial is cheap VPU work.
    cdf = 0.5 * (1.0 + jnp.tanh(_SQRT_2_OVER_PI * (x + 0.044715 * (x * x * x))))
    o_ref[...] = (x * cdf).astype(o_ref.dtype)


def gelu(x: jax.Array, *, target_block_bytes: int = 2 * 1024 * 1024) -> jax.Array:
    """Tanh-approx GELU matching the PyTorch reference module."""
    orig_shape = x.shape
    orig_dtype = x.dtype
    n = x.size
    itemsize = jnp.dtype(orig_dtype).itemsize
    # Sublane packing multiple: 8 for 32-bit, 16 for bf16, 32 for int8.
    pack = max(8, 32 // itemsize)

    # Pick the widest lane-dense slab that divides n evenly (no padding);
    # fall back to 128 lanes (+ padding) for ragged sizes.
    lanes = 128
    for cand in (1024, 512, 256, 128):
        if n % (pack * cand) == 0:
            lanes = cand
            break

    # Row tile: ~target_block_bytes per block, rounded down to the sublane
    # pack; small inputs collapse to a single block.
    cap_rows = max(pack, (target_block_bytes // (lanes * itemsize)) // pack * pack)
    rows_min = pl.cdiv(n, lanes)
    tm = min(cap_rows, pl.cdiv(rows_min, pack) * pack)
    rows = pl.cdiv(rows_min, tm) * tm          # pad rows to a multiple of tm
    n_pad = rows * lanes - n

    x_flat = x.reshape(-1)
    if n_pad:
        x_flat = jnp.pad(x_flat, (0, n_pad))
    x2d = x_flat.reshape(rows, lanes)

    out2d = pl.pallas_call(
        _gelu_kernel,
        out_shape=jax.ShapeDtypeStruct((rows, lanes), orig_dtype),
        grid_spec=pltpu.PrefetchScalarGridSpec(
            num_scalar_prefetch=0,
            grid=(rows // tm,),
            in_specs=[pl.BlockSpec((tm, lanes), lambda i: (i, 0))],
            out_specs=pl.BlockSpec((tm, lanes), lambda i: (i, 0)),
        ),
        compiler_params=pltpu.CompilerParams(
            dimension_semantics=("parallel",),
        ),
        cost_estimate=pl.CostEstimate(
            flops=8 * n,
            transcendentals=n,
            bytes_accessed=2 * n * itemsize,
        ),
    )(x2d)

    out_flat = out2d.reshape(-1)
    if n_pad:
        out_flat = out_flat[:n]
    return out_flat.reshape(orig_shape)


def _gelu_ref(x):
    c = math.sqrt(2.0 / math.pi)
    return x * (0.5 * (1.0 + jnp.tanh(c * (x + 0.044715 * x**3))))


if __name__ == "__main__":
    key = jax.random.PRNGKey(0)

    # Small 4D tensor (e.g. activations of shape [batch, channels, H, W]);
    # evenly divisible size -> no-padding fast path.
    x = jax.random.normal(key, (2, 4, 16, 16), dtype=jnp.float32)
    out = jax.block_until_ready(gelu(x))
    assert out.shape == x.shape and out.dtype == x.dtype
    assert jnp.allclose(out, _gelu_ref(x), atol=1e-6, rtol=1e-6)

    # Ragged-size tensor to exercise the padding path.
    key2 = jax.random.PRNGKey(0)
    y = jax.random.normal(key2, (3, 5, 7), dtype=jnp.float32)
    out_y = jax.block_until_ready(gelu(y))
    assert out_y.shape == y.shape and out_y.dtype == y.dtype
    assert jnp.allclose(out_y, _gelu_ref(y), atol=1e-6, rtol=1e-6)

    # Larger tensor whose row count is not a multiple of the tile
    # (exercises the pad-rows-to-tile path with multi-step grid).
    z = jax.random.normal(key, (3, 7, 31, 129), dtype=jnp.float32)
    out_z = jax.block_until_ready(gelu(z))
    assert out_z.shape == z.shape and out_z.dtype == z.dtype
    assert jnp.allclose(out_z, _gelu_ref(z), atol=1e-6, rtol=1e-6)

    print("KERNEL_OK")
</pallas_src>

<mosaic_0001>
module attributes {stable_mosaic.version = 11 : i64} {
  func.func @_gelu_kernel(%arg0: i32, %arg1: memref<8x256xf32, #tpu.memory_space<vmem>>, %arg2: memref<8x256xf32, #tpu.memory_space<vmem>>) attributes {dimension_semantics = [#tpu.dimension_semantics<parallel>], iteration_bounds = array<i64: 1>, scalar_prefetch = 0 : i64, scratch_operands = 0 : i64, tpu.core_type = #tpu.core_type<tc>, window_params = [{transform_indices = @transform_0, window_bounds = array<i64: 8, 256>}, {transform_indices = @transform_1, window_bounds = array<i64: 8, 256>}]} {
    %c0 = arith.constant 0 : index
    %c0_0 = arith.constant 0 : index
    %0 = vector.load %arg1[%c0, %c0_0] : memref<8x256xf32, #tpu.memory_space<vmem>>, vector<8x256xf32>
    %1 = arith.mulf %0, %0 : vector<8x256xf32>
    %2 = arith.mulf %1, %0 : vector<8x256xf32>
    %cst = arith.constant 4.471500e-02 : f32
    %3 = vector.broadcast %cst : f32 to vector<8x256xf32>
    %4 = arith.mulf %3, %2 : vector<8x256xf32>
    %5 = arith.addf %0, %4 : vector<8x256xf32>
    %cst_1 = arith.constant 0.797884583 : f32
    %6 = vector.broadcast %cst_1 : f32 to vector<8x256xf32>
    %7 = arith.mulf %6, %5 : vector<8x256xf32>
    %8 = math.tanh %7 : vector<8x256xf32>
    %cst_2 = arith.constant 1.000000e+00 : f32
    %9 = vector.broadcast %cst_2 : f32 to vector<8x256xf32>
    %10 = arith.addf %9, %8 : vector<8x256xf32>
    %cst_3 = arith.constant 5.000000e-01 : f32
    %11 = vector.broadcast %cst_3 : f32 to vector<8x256xf32>
    %12 = arith.mulf %11, %10 : vector<8x256xf32>
    %13 = arith.mulf %0, %12 : vector<8x256xf32>
    %c0_4 = arith.constant 0 : index
    %c0_5 = arith.constant 0 : index
    %14 = vector.load %arg2[%c0_4, %c0_5] : memref<8x256xf32, #tpu.memory_space<vmem>>, vector<8x256xf32>
    tpu.vector_store %arg2[%c0_4, %c0_5], %13 {strides = array<i32>} : memref<8x256xf32, #tpu.memory_space<vmem>>, vector<8x256xf32>,
    return
  }
  func.func @transform_0(%arg0: i32) -> (i32, i32) {
    %c0_i32 = arith.constant 0 : i32
    %c0_i32_0 = arith.constant 0 : i32
    return %arg0, %c0_i32 : i32, i32
  }
  func.func @transform_1(%arg0: i32) -> (i32, i32) {
    %c0_i32 = arith.constant 0 : i32
    %c0_i32_0 = arith.constant 0 : i32
    return %arg0, %c0_i32 : i32, i32
  }
}

</mosaic_0001>

<llo_original>
// kernel: tpu_custom_call.1
$region0: #{tpu_custom_call.1}
  #allocation0 [shape = 'u32[]', space=smem, size = 0x4, offset = 0x4, fixed_abs, tag = 'smem constant byte address 0x4 - core index']
  #allocation1 [shape = 'u32[144,128]{1,0:T(1,128)}', space=vmem, size = 0x12000, scoped, tag = 'internal scratch']
  %s0 = inlined_call_operand.hbm [shape: f32[8,256], index: 0, kind: input, shape index: {}]
  %s1 = inlined_call_operand.hbm [shape: f32[8,256], index: 1, kind: output, shape index: {}]
  %s2 = sld [smem:[#allocation0]]
  $region18: #{tpu_custom_call.1} parent=0
    _
  %s4 = ssub.s32 1, %s2
  %s5 = scalar_select 0, %s4, %s2
  $region1: #{tpu_custom_call.1} parent=0
    #allocation2 [shape = 'u8[8192]{0}', space=vmem, size = 0x2000, scoped, tag = 'input window, operand 0, single buffered']
    #allocation3 [shape = 's32[1]{0}', space=sflag, size = 0x4, scoped, tag = 'scoped memory for tpu_custom_call.1']
    #allocation4 [shape = 's32[1]{0}', space=sflag, size = 0x4, scoped, tag = 'scoped memory for tpu_custom_call.1']
    #allocation5 [shape = 'u8[8192]{0}', space=vmem, size = 0x2000, scoped, tag = 'output window, operand 0, single buffered']
    %6 = vsyncpa [#allocation3], 0
    %7 = vsyncpa [#allocation4], 0
    // Predicated region
    $region2: #{tpu_custom_call.1} parent=1 // pred_check
      _
    $region3: #{tpu_custom_call.1} parent=1 // pred_check_branch
      %9 = sbr.rel (0) target = $region5
    $region4: #{tpu_custom_call.1} parent=1 // pred_region
      %s11 = ssub.s32 256, 256
      %12 = vsyncadd [#allocation3], %s11
      %s14 = sshll.u32 [#allocation2], 4
      %s15 = int_to_ptr.vmem [resolvable:$true] %s14
      %17 = dma.hbm_to_vmem [thread:$0]  %s0, 256, %s15, [#allocation3]
    $region5: #{tpu_custom_call.1} parent=1 // pred_fallthru
      _
    // Predicated region
    $region6: #{tpu_custom_call.1} parent=1 // pred_check
      _
    $region7: #{tpu_custom_call.1} parent=1 // pred_check_branch
      %19 = sbr.rel (0) target = $region9
    $region8: #{tpu_custom_call.1} parent=1 // pred_region
      %20 = dma.done [#allocation3], 256
    $region9: #{tpu_custom_call.1} parent=1 // pred_fallthru
      _
    %v21 = vld [vmem:[#allocation2] sm:$0xff]
    %v22 = vld [vmem:[#allocation2 + $0x8] sm:$0xff]
    %v23 = vmul.f32 %v21, %v21
    %v24 = vmul.f32 %v22, %v22
    %v25 = vmul.f32 %v23, %v21
    %v26 = vmul.f32 %v24, %v22
    %v27 = vmul.f32 %v25, 0.044715
    %v28 = vmul.f32 %v26, 0.044715
    %v29 = vadd.f32 %v21, %v27
    %v30 = vadd.f32 %v22, %v28
    %v31 = vmul.f32 %v29, 0.7978846
    %v32 = vmul.f32 %v30, 0.7978846
    %v33 = vtanh.pop %v31
    %v34 = vtanh.pop %v32
    %v35 = vadd.f32 %v33, 1.0
    %v36 = vadd.f32 %v34, 1.0
    %v37 = vmul.f32 %v35, 0.5
    %v38 = vmul.f32 %v36, 0.5
    %v39 = vmul.f32 %v21, %v37
    %v40 = vmul.f32 %v22, %v38
    %41 = vst [vmem:[#allocation5] sm:$0xff] %v39
    %42 = vst [vmem:[#allocation5 + $0x8] sm:$0xff] %v40
    // Predicated region
    $region10: #{tpu_custom_call.1} parent=1 // pred_check
      _
    $region11: #{tpu_custom_call.1} parent=1 // pred_check_branch
      %44 = sbr.rel (0) target = $region13
    $region12: #{tpu_custom_call.1} parent=1 // pred_region
      %s46 = ssub.s32 256, 256
      %47 = vsyncadd [#allocation4], %s46
      %s49 = sshll.u32 [#allocation5], 4
      %s50 = int_to_ptr.vmem [resolvable:$true] %s49
      %52 = dma.vmem_to_hbm [thread:$0]  %s50, 256, %s1, [#allocation4]
    $region13: #{tpu_custom_call.1} parent=1 // pred_fallthru
      _
    // Predicated region
    $region14: #{tpu_custom_call.1} parent=1 // pred_check
      _
    $region15: #{tpu_custom_call.1} parent=1 // pred_check_branch
      %54 = sbr.rel (0) target = $region17
    $region16: #{tpu_custom_call.1} parent=1 // pred_region
      %55 = dma.done [#allocation4], 256
    $region17: #{tpu_custom_call.1} parent=1 // pred_fallthru
      _
    %56 = vsyncpa [#allocation3], 1
    %57 = vsyncpa [#allocation4], 1

</llo_original>
